<compile_context>
chip_gen: v6e
topology: v6e:2x2x1
jax: 0.10.0
libtpu: 0.0.40
codegen_flags: <defaults>
</compile_context>

<pallas_src>
import functools

import numpy as np
import jax
import jax.numpy as jnp
from jax import lax
from jax.experimental import pallas as pl
from jax.experimental.pallas import tpu as pltpu


# ----------------------------------------------------------------------------
# Kernels
# ----------------------------------------------------------------------------

def _impl_synth_kernel_nlanes(styles_ref, w_ref, bias_ref, x_ref, o_ref, *,
                              act_scale, clamp):
    """Small-channel path: N on the lane dim. x (cin, tn) -> out (cout, tn)."""
    x = x_ref[0]                                              # (cin, tn), x dtype
    # Fold modulation + demodulation + activation gain into the weight (tiny vs matmul).
    styles = styles_ref[0]                                    # (1, cin), f32
    wm = w_ref[...] * styles                                  # (cout, cin), f32
    dcoef = lax.rsqrt(jnp.sum(wm * wm, axis=1, keepdims=True) + 1e-8)   # (cout, 1)
    wfold = (wm * (dcoef * act_scale)).astype(x.dtype)        # cast once, here
    # Single MXU matmul with f32 accumulation, lane-dense output.
    y = jnp.dot(wfold, x, preferred_element_type=jnp.float32)           # (cout, tn)
    y = y + bias_ref[...]                                     # (cout, 1), pre-scaled
    y = jnp.maximum(y, 0.2 * y)                               # lrelu (1 VPU op)
    if clamp is not None:
        y = jnp.clip(y, -clamp, clamp)
    o_ref[0] = y.astype(o_ref.dtype)


def _impl_synth_kernel_clanes(styles_ref, wt_ref, bias_ref, x_ref, o_ref, *,
                              act_scale, clamp):
    """Wide-channel path: channels on the lane dim. x (tn, cin) -> out (tn, cout)."""
    x = x_ref[0]                                              # (tn, cin), x dtype
    styles = styles_ref[0]                                    # (cin, 1), f32
    wm = wt_ref[...] * styles                                 # (cin, cout), f32
    dcoef = lax.rsqrt(jnp.sum(wm * wm, axis=0, keepdims=True) + 1e-8)   # (1, cout)
    wfold = (wm * (dcoef * act_scale)).astype(x.dtype)
    y = jnp.dot(x, wfold, preferred_element_type=jnp.float32)           # (tn, cout)
    y = y + bias_ref[...]                                     # (1, cout), pre-scaled
    y = jnp.maximum(y, 0.2 * y)
    if clamp is not None:
        y = jnp.clip(y, -clamp, clamp)
    o_ref[0] = y.astype(o_ref.dtype)


# ----------------------------------------------------------------------------
# Wrapper
# ----------------------------------------------------------------------------

def _vmem_capacity_bytes():
    try:
        return int(pltpu.get_tpu_info().vmem_capacity_bytes)
    except Exception:
        return 64 * 1024 * 1024        # conservative default (v7x-sized)


def _pick_tile_n(N, per_point_bytes, vmem_budget_bytes, tile_n_hint=None):
    """Largest legal N-tile: tn == N, or a multiple of 128 that divides N."""
    max_tn = max(128, int(vmem_budget_bytes // max(per_point_bytes, 1)))
    if tile_n_hint is not None:
        max_tn = min(max_tn, max(128, int(tile_n_hint)))
    if N <= max_tn:
        return N
    tn = (max_tn // 128) * 128
    while tn >= 128:
        if N % tn == 0:
            return tn
        tn -= 128
    # TODO(synk): no masked tail handling for awkward N; fall back to whole-N tiles.
    return N


def implicit_synthesis_forward(w_lat, x, params, *, gain=1.0, conv_clamp=None,
                               tile_n=None):
    """params = (affine_w[cin, w_dim], affine_b[cin], weight[cout, cin], bias[cout]).

    x: (B, N, cin) -> (B, N, cout), output dtype follows x.
    """
    affine_w, affine_b, weight, bias = params
    B, N, cin = x.shape
    cout = weight.shape[0]
    w_dim = w_lat.shape[1]

    # --- glue: parameter plumbing + the tiny per-batch affine FC (O(B*w_dim*cin)) ---
    styles = (jnp.dot(w_lat.astype(jnp.float32), affine_w.astype(jnp.float32).T)
              * (1.0 / np.sqrt(w_dim)) + affine_b.astype(jnp.float32))   # (B, cin)
    act_scale = float(np.sqrt(2.0) * gain)             # lrelu def_gain * gain (folded)
    act_clamp = None if conv_clamp is None else float(conv_clamp * gain)
    bias_scaled = bias.astype(jnp.float32) * act_scale  # fold act_scale into bias too
    weight_f32 = weight.astype(jnp.float32)

    # --- tiling: bounded by this generation's VMEM (v5e/v6e 128 MiB, v7x 64 MiB) ---
    vmem_cap = _vmem_capacity_bytes()
    itemsize = x.dtype.itemsize
    per_point = 2 * (cin + cout) * itemsize             # double-buffered x + out bytes
    tn = _pick_tile_n(N, per_point, vmem_cap // 3, tile_n)
    nt = N // tn if N % tn == 0 else 1
    if N % tn != 0:
        tn = N
    est_bytes = 2 * tn * (cin + cout) * itemsize + 8 * (cin * cout + cin + cout)
    vmem_limit = None
    if est_bytes > 30 * 1024 * 1024:                     # only raise past scoped default
        vmem_limit = min(int(est_bytes * 2), vmem_cap - (8 << 20))

    cparams = pltpu.CompilerParams(
        dimension_semantics=("parallel", "parallel"),    # fold recomputed per tile
        vmem_limit_bytes=vmem_limit)

    use_nlanes = max(cin, cout) < 128                    # tiny channels -> N on lanes

    if use_nlanes:
        kernel = functools.partial(_impl_synth_kernel_nlanes,
                                   act_scale=act_scale, clamp=act_clamp)
        x_t = jnp.swapaxes(x, 1, 2)                      # (B, cin, N): lane-dense tiles
        out_t = pl.pallas_call(
            kernel,
            out_shape=jax.ShapeDtypeStruct((B, cout, N), x.dtype),
            grid=(B, nt),
            in_specs=[
                pl.BlockSpec((1, 1, cin), lambda b, t: (b, 0, 0)),      # styles row
                pl.BlockSpec((cout, cin), lambda b, t: (0, 0)),         # weight
                pl.BlockSpec((cout, 1), lambda b, t: (0, 0)),           # bias col
                pl.BlockSpec((1, cin, tn), lambda b, t: (b, 0, t)),     # x tile
            ],
            out_specs=pl.BlockSpec((1, cout, tn), lambda b, t: (b, 0, t)),
            compiler_params=cparams,
        )(styles.reshape(B, 1, cin), weight_f32, bias_scaled.reshape(cout, 1), x_t)
        return jnp.swapaxes(out_t, 1, 2)                 # back to (B, N, cout)

    kernel = functools.partial(_impl_synth_kernel_clanes,
                               act_scale=act_scale, clamp=act_clamp)
    return pl.pallas_call(
        kernel,
        out_shape=jax.ShapeDtypeStruct((B, N, cout), x.dtype),
        grid=(B, nt),
        in_specs=[
            pl.BlockSpec((1, cin, 1), lambda b, t: (b, 0, 0)),          # styles col
            pl.BlockSpec((cin, cout), lambda b, t: (0, 0)),             # weight.T
            pl.BlockSpec((1, cout), lambda b, t: (0, 0)),               # bias row
            pl.BlockSpec((1, tn, cin), lambda b, t: (b, t, 0)),         # x tile
        ],
        out_specs=pl.BlockSpec((1, tn, cout), lambda b, t: (b, t, 0)),
        compiler_params=cparams,
    )(styles.reshape(B, cin, 1), weight_f32.T, bias_scaled.reshape(1, cout), x)


# ----------------------------------------------------------------------------
# Pure-JAX reference (mirrors the PyTorch ImplicitSynthesisLayer.forward)
# ----------------------------------------------------------------------------

def reference(w_lat, x, params, *, gain=1.0, conv_clamp=None):
    affine_w, affine_b, weight, bias = params
    w_dim = w_lat.shape[1]
    styles = w_lat @ (affine_w * (1.0 / np.sqrt(w_dim))).T + affine_b   # (B, cin)
    wmod = weight[None] * styles[:, None, :]                            # (B, cout, cin)
    dcoefs = lax.rsqrt(jnp.sum(wmod * wmod, axis=2) + 1e-8)             # (B, cout)
    wmod = wmod * dcoefs[:, :, None]
    y = jnp.einsum('bnc,boc->bno', x, wmod)                             # bmm(x, w.T)
    y = y + bias[None, None, :]
    y = jnp.where(y >= 0.0, y, 0.2 * y) * (np.sqrt(2.0) * gain)
    if conv_clamp is not None:
        y = jnp.clip(y, -conv_clamp * gain, conv_clamp * gain)
    return y


if __name__ == "__main__":
    key = jax.random.PRNGKey(0)
    ks = jax.random.split(key, 6)

    # ---- config 1: tiny channels (as in the triplane texture predictor) ----
    B, cin, cout, w_dim, N = 2, 4, 8, 32, 256
    x = jax.random.normal(ks[0], (B, N, cin), jnp.float32)
    w_lat = jax.random.normal(ks[1], (B, w_dim), jnp.float32)
    affine_w = jax.random.normal(ks[2], (cin, w_dim), jnp.float32)       # affine FC weight
    affine_b = jnp.ones((cin,), jnp.float32)                             # bias_init=1
    weight = jax.random.normal(ks[3], (cout, cin), jnp.float32)
    bias = 0.1 * jax.random.normal(ks[4], (cout,), jnp.float32)
    params = (affine_w, affine_b, weight, bias)

    out = jax.block_until_ready(implicit_synthesis_forward(w_lat, x, params))
    ref = reference(w_lat, x, params)
    assert out.shape == (B, N, cout) and out.dtype == x.dtype
    np.testing.assert_allclose(np.asarray(out), np.asarray(ref), rtol=2e-3, atol=2e-3)

    # bf16 I/O on the same config (fold + accumulation stay f32 inside the kernel)
    x_bf = x.astype(jnp.bfloat16)
    out_bf = jax.block_until_ready(implicit_synthesis_forward(w_lat, x_bf, params))
    ref_bf = reference(w_lat, x_bf.astype(jnp.float32), params)
    assert out_bf.dtype == jnp.bfloat16
    np.testing.assert_allclose(np.asarray(out_bf, dtype=np.float32),
                               np.asarray(ref_bf), rtol=1e-1, atol=1e-1)

    # ---- config 2: wide channels -> channels-on-lanes path, with gain & clamp ----
    B2, cin2, cout2, w_dim2, N2 = 2, 128, 128, 32, 256
    x2 = jax.random.normal(ks[5], (B2, N2, cin2), jnp.float32)
    w_lat2 = jax.random.normal(ks[1], (B2, w_dim2), jnp.float32)
    affine_w2 = jax.random.normal(ks[2], (cin2, w_dim2), jnp.float32)
    affine_b2 = jnp.ones((cin2,), jnp.float32)
    weight2 = jax.random.normal(ks[3], (cout2, cin2), jnp.float32)
    bias2 = 0.1 * jax.random.normal(ks[4], (cout2,), jnp.float32)
    params2 = (affine_w2, affine_b2, weight2, bias2)

    out2 = jax.block_until_ready(
        implicit_synthesis_forward(w_lat2, x2, params2, gain=1.5, conv_clamp=4.0))
    ref2 = reference(w_lat2, x2, params2, gain=1.5, conv_clamp=4.0)
    np.testing.assert_allclose(np.asarray(out2), np.asarray(ref2), rtol=2e-3, atol=2e-3)

    print("KERNEL_OK")
</pallas_src>

<mosaic_0001>
module attributes {stable_mosaic.version = 11 : i64} {
  func.func @_impl_synth_kernel_nlanes(%arg0: i32, %arg1: i32, %arg2: memref<1x1x4xf32, #tpu.memory_space<vmem>>, %arg3: memref<8x4xf32, #tpu.memory_space<vmem>>, %arg4: memref<8x1xf32, #tpu.memory_space<vmem>>, %arg5: memref<1x4x256xf32, #tpu.memory_space<vmem>>, %arg6: memref<1x8x256xf32, #tpu.memory_space<vmem>>) attributes {dimension_semantics = [#tpu.dimension_semantics<parallel>, #tpu.dimension_semantics<parallel>], iteration_bounds = array<i64: 2, 1>, scalar_prefetch = 0 : i64, scratch_operands = 0 : i64, tpu.core_type = #tpu.core_type<tc>, window_params = [{transform_indices = @transform_0, window_bounds = array<i64: 1, 1, 4>}, {pipeline_mode = #tpu.pipeline_mode<synchronous>, transform_indices = @transform_1, window_bounds = array<i64: 8, 4>}, {pipeline_mode = #tpu.pipeline_mode<synchronous>, transform_indices = @transform_2, window_bounds = array<i64: 8, 1>}, {transform_indices = @transform_3, window_bounds = array<i64: 1, 4, 256>}, {transform_indices = @transform_4, window_bounds = array<i64: 1, 8, 256>}]} {
    %c0 = arith.constant 0 : index
    %c0_0 = arith.constant 0 : index
    %c0_1 = arith.constant 0 : index
    %0 = vector.load %arg5[%c0, %c0_0, %c0_1] : memref<1x4x256xf32, #tpu.memory_space<vmem>>, vector<1x4x256xf32>
    %1 = vector.shape_cast %0 : vector<1x4x256xf32> to vector<4x256xf32>
    %c0_2 = arith.constant 0 : index
    %c0_3 = arith.constant 0 : index
    %c0_4 = arith.constant 0 : index
    %2 = vector.load %arg2[%c0_2, %c0_3, %c0_4] : memref<1x1x4xf32, #tpu.memory_space<vmem>>, vector<1x1x4xf32>
    %3 = vector.shape_cast %2 : vector<1x1x4xf32> to vector<1x4xf32>
    %c0_5 = arith.constant 0 : index
    %c0_6 = arith.constant 0 : index
    %4 = vector.load %arg3[%c0_5, %c0_6] : memref<8x4xf32, #tpu.memory_space<vmem>>, vector<8x4xf32>
    %5 = vector.broadcast %3 : vector<1x4xf32> to vector<8x4xf32>
    %6 = arith.mulf %4, %5 : vector<8x4xf32>
    %7 = arith.mulf %6, %6 : vector<8x4xf32>
    %cst = arith.constant dense<0.000000e+00> : vector<8xf32>
    %8 = vector.multi_reduction <add>, %7, %cst [1] : vector<8x4xf32> to vector<8xf32>
    %9 = vector.shape_cast %8 : vector<8xf32> to vector<8x1xf32>
    %cst_7 = arith.constant 9.99999993E-9 : f32
    %10 = vector.broadcast %cst_7 : f32 to vector<8x1xf32>
    %11 = arith.addf %9, %10 : vector<8x1xf32>
    %12 = math.rsqrt %11 : vector<8x1xf32>
    %cst_8 = arith.constant 1.41421354 : f32
    %13 = vector.broadcast %cst_8 : f32 to vector<8x1xf32>
    %14 = arith.mulf %12, %13 : vector<8x1xf32>
    %15 = vector.broadcast %14 : vector<8x1xf32> to vector<8x4xf32>
    %16 = arith.mulf %6, %15 : vector<8x4xf32>
    %cst_9 = arith.constant dense<0.000000e+00> : vector<8x256xf32>
    %17 = tpu.matmul %16, %1, %cst_9 {dimension_numbers = #tpu.dot_dimension_numbers<[1], [0], [0], [1], [0, 0, 1, 1], [], []>} : vector<8x4xf32>, vector<4x256xf32>, vector<8x256xf32> -> vector<8x256xf32>
    %c0_10 = arith.constant 0 : index
    %c0_11 = arith.constant 0 : index
    %18 = vector.load %arg4[%c0_10, %c0_11] : memref<8x1xf32, #tpu.memory_space<vmem>>, vector<8x1xf32>
    %19 = vector.broadcast %18 : vector<8x1xf32> to vector<8x256xf32>
    %20 = arith.addf %17, %19 : vector<8x256xf32>
    %cst_12 = arith.constant 2.000000e-01 : f32
    %21 = vector.broadcast %cst_12 : f32 to vector<8x256xf32>
    %22 = arith.mulf %21, %20 : vector<8x256xf32>
    %23 = arith.maximumf %20, %22 : vector<8x256xf32>
    %c0_13 = arith.constant 0 : index
    %c0_14 = arith.constant 0 : index
    %c0_15 = arith.constant 0 : index
    %24 = vector.load %arg6[%c0_13, %c0_14, %c0_15] : memref<1x8x256xf32, #tpu.memory_space<vmem>>, vector<1x8x256xf32>
    %25 = vector.shape_cast %24 : vector<1x8x256xf32> to vector<8x256xf32>
    %26 = vector.shape_cast %23 : vector<8x256xf32> to vector<1x8x256xf32>
    tpu.vector_store %arg6[%c0_13, %c0_14, %c0_15], %26 {strides = array<i32>} : memref<1x8x256xf32, #tpu.memory_space<vmem>>, vector<1x8x256xf32>,
    return
  }
  func.func @transform_0(%arg0: i32, %arg1: i32) -> (i32, i32, i32) {
    %c0_i32 = arith.constant 0 : i32
    %c0_i32_0 = arith.constant 0 : i32
    %c0_i32_1 = arith.constant 0 : i32
    return %arg0, %c0_i32, %c0_i32_0 : i32, i32, i32
  }
  func.func @transform_1(%arg0: i32, %arg1: i32) -> (i32, i32) {
    %c0_i32 = arith.constant 0 : i32
    %c0_i32_0 = arith.constant 0 : i32
    %c0_i32_1 = arith.constant 0 : i32
    return %c0_i32, %c0_i32_0 : i32, i32
  }
  func.func @transform_2(%arg0: i32, %arg1: i32) -> (i32, i32) {
    %c0_i32 = arith.constant 0 : i32
    %c0_i32_0 = arith.constant 0 : i32
    %c0_i32_1 = arith.constant 0 : i32
    return %c0_i32, %c0_i32_0 : i32, i32
  }
  func.func @transform_3(%arg0: i32, %arg1: i32) -> (i32, i32, i32) {
    %c0_i32 = arith.constant 0 : i32
    %c0_i32_0 = arith.constant 0 : i32
    return %arg0, %c0_i32, %arg1 : i32, i32, i32
  }
  func.func @transform_4(%arg0: i32, %arg1: i32) -> (i32, i32, i32) {
    %c0_i32 = arith.constant 0 : i32
    %c0_i32_0 = arith.constant 0 : i32
    return %arg0, %c0_i32, %arg1 : i32, i32, i32
  }
}

</mosaic_0001>

<llo_original>
// kernel: tpu_custom_call.1
$region0: #{tpu_custom_call.1}
  #allocation0 [shape = 'u32[]', space=smem, size = 0x4, offset = 0x4, fixed_abs, tag = 'smem constant byte address 0x4 - core index']
  #allocation1 [shape = 'u32[144,128]{1,0:T(1,128)}', space=vmem, size = 0x12000, scoped, tag = 'internal scratch']
  %s0 = inlined_call_operand.vmem [shape: f32[2,1,4], index: 0, kind: input, shape index: {}]
  %s1 = inlined_call_operand.vmem [shape: f32[8,4], index: 1, kind: input, shape index: {}]
  %s2 = inlined_call_operand.vmem [shape: f32[8,1], index: 2, kind: input, shape index: {}]
  %s3 = inlined_call_operand.vmem [shape: f32[2,4,256], index: 3, kind: input, shape index: {}]
  %s4 = inlined_call_operand.hbm [shape: f32[2,8,256], index: 4, kind: output, shape index: {}]
  %s5 = sld [smem:[#allocation0]]
  $region49: #{tpu_custom_call.1} parent=0
    _
  %s7 = ssub.s32 1, %s5
  %s8 = scalar_select 0, %s7, %s5
  $region1: #{tpu_custom_call.1} parent=0
    #allocation2 [shape = 'u8[16384]{0}', space=vmem, size = 0x4000, scoped, tag = 'output window, operand 0']
    #allocation3 [shape = 's32[2]{0}', space=sflag, size = 0x8, scoped, tag = 'scoped memory for tpu_custom_call.1']
    %9 = vsyncpa [#allocation3], 0
    %s10 = scalar_lea.sflag [#allocation3], 1
    %11 = vsyncpa %s10, 0
    loop: start=0, step=1, limit=4
    $region2: #{tpu_custom_call.1} parent=1 // loop_pre_header
      _
    $region3: #{tpu_custom_call.1} parent=1 // loop_header
      %s13 = sphi 0, %s17
      %p14 = scmp.ge.s32.totalorder %s13, 4
      %s20 = sphi 0, %s32
      %s21 = sphi 0, %s28
      %s22 = sphi 0, %s20
      %s23 = sphi 0, %s21
      %s24 = sphi 0, %s22
      %s25 = sphi 0, %s23
      %s35 = sphi 0, %s37
      %s38 = sphi 0, %s35
      %s39 = sphi 0, %s38
      %s55 = sphi 0, %s39
      %s59 = sphi 0, %s59
      %s61 = sphi 0, %s59
      %s62 = sphi 0, %s61
      %s76 = sphi 0, %s62
      %s80 = sphi 0, %s80
      %s82 = sphi 0, %s80
      %s83 = sphi 0, %s82
      %s97 = sphi 0, %s83
      %s105 = sphi 0, %s107
      %s108 = sphi 0, %s105
      %s109 = sphi 0, %s108
      %s125 = sphi 0, %s109
      %s133 = sphi 0, %s135
      %s136 = sphi 0, %s133
      %s137 = sphi 0, %s136
      %s153 = sphi 0, %s137
    $region4: #{tpu_custom_call.1} parent=1 // loop_header_branch
      %16 = sbr.rel (%p14) target = $region8
    $region5: #{tpu_custom_call.1} parent=1 // loop_body
      %s18 = ssub.s32 %s13, 1
      %s19 = ssub.s32 %s13, 2
      %s26 = sadd.s32 1, %s21
      %p27 = scmp.ge.s32.totalorder %s26, 1
      %s28 = scalar_select %p27, 0, %s26
      %s29 = sadd.s32 1, %s20
      %s30 = scalar_select %p27, %s29, %s20
      %p31 = scmp.ge.s32.totalorder %s30, 2
      %s32 = scalar_select %p31, 0, %s30
      %s33 = ssub.s32 %s20, %s32
      %p34 = scmp.eq.s32.totalorder %s33, 0
      %s36 = sadd.s32 %s35, 1
      %s37 = scalar_select %p34, %s35, %s36
      %p40 = pneg %p34
      %p41 = scmp.eq.s32.totalorder %s13, 1
      %p42 = por %p40, %p41
      %p43 = scmp.ne.s32.totalorder %s35, %s38
      %p44 = scmp.eq.s32.totalorder %s13, 0
      %p45 = por %p43, %p44
      %p46 = scmp.ne.s32.totalorder %s35, %s38
      %p47 = scmp.eq.s32.totalorder %s18, 1
      %p48 = por %p46, %p47
      %p49 = scmp.ne.s32.totalorder %s38, %s39
      %p50 = scmp.eq.s32.totalorder %s18, 0
      %p51 = por %p49, %p50
      %p52 = scmp.ne.s32.totalorder %s38, %s39
      %p53 = scmp.eq.s32.totalorder %s19, 1
      %p54 = por %p52, %p53
      %p56 = scmp.ne.s32.totalorder %s39, %s55
      %p57 = scmp.eq.s32.totalorder %s19, 0
      %p58 = por %p56, %p57
      %s60 = sadd.s32 %s59, 1
      %p63 = scmp.eq.s32.totalorder %s13, 1
      %p64 = scmp.ne.s32.totalorder %s59, %s61
      %p65 = scmp.eq.s32.totalorder %s13, 0
      %p66 = por %p64, %p65
      %p67 = scmp.ne.s32.totalorder %s59, %s61
      %p68 = scmp.eq.s32.totalorder %s18, 1
      %p69 = por %p67, %p68
      %p70 = scmp.ne.s32.totalorder %s61, %s62
      %p71 = scmp.eq.s32.totalorder %s18, 0
      %p72 = por %p70, %p71
      %p73 = scmp.ne.s32.totalorder %s61, %s62
      %p74 = scmp.eq.s32.totalorder %s19, 1
      %p75 = por %p73, %p74
      %p77 = scmp.ne.s32.totalorder %s62, %s76
      %p78 = scmp.eq.s32.totalorder %s19, 0
      %p79 = por %p77, %p78
      %s81 = sadd.s32 %s80, 1
      %p84 = scmp.eq.s32.totalorder %s13, 1
      %p85 = scmp.ne.s32.totalorder %s80, %s82
      %p86 = scmp.eq.s32.totalorder %s13, 0
      %p87 = por %p85, %p86
      %p88 = scmp.ne.s32.totalorder %s80, %s82
      %p89 = scmp.eq.s32.totalorder %s18, 1
      %p90 = por %p88, %p89
      %p91 = scmp.ne.s32.totalorder %s82, %s83
      %p92 = scmp.eq.s32.totalorder %s18, 0
      %p93 = por %p91, %p92
      %p94 = scmp.ne.s32.totalorder %s82, %s83
      %p95 = scmp.eq.s32.totalorder %s19, 1
      %p96 = por %p94, %p95
      %p98 = scmp.ne.s32.totalorder %s83, %s97
      %p99 = scmp.eq.s32.totalorder %s19, 0
      %p100 = por %p98, %p99
      %s101 = ssub.s32 %s20, %s32
      %s102 = ssub.s32 %s21, %s28
      %s103 = sor.u32 %s101, %s102
      %p104 = scmp.eq.s32.totalorder %s103, 0
      %s106 = sadd.s32 %s105, 1
      %s107 = scalar_select %p104, %s105, %s106
      %p110 = pneg %p104
      %p111 = scmp.eq.s32.totalorder %s13, 1
      %p112 = por %p110, %p111
      %p113 = scmp.ne.s32.totalorder %s105, %s108
      %p114 = scmp.eq.s32.totalorder %s13, 0
      %p115 = por %p113, %p114
      %p116 = scmp.ne.s32.totalorder %s105, %s108
      %p117 = scmp.eq.s32.totalorder %s18, 1
      %p118 = por %p116, %p117
      %p119 = scmp.ne.s32.totalorder %s108, %s109
      %p120 = scmp.eq.s32.totalorder %s18, 0
      %p121 = por %p119, %p120
      %p122 = scmp.ne.s32.totalorder %s108, %s109
      %p123 = scmp.eq.s32.totalorder %s19, 1
      %p124 = por %p122, %p123
      %p126 = scmp.ne.s32.totalorder %s109, %s125
      %p127 = scmp.eq.s32.totalorder %s19, 0
      %p128 = por %p126, %p127
      %s129 = ssub.s32 %s20, %s32
      %s130 = ssub.s32 %s21, %s28
      %s131 = sor.u32 %s129, %s130
      %p132 = scmp.eq.s32.totalorder %s131, 0
      %s134 = sadd.s32 %s133, 1
      %s135 = scalar_select %p132, %s133, %s134
      %p138 = pneg %p132
      %p139 = scmp.eq.s32.totalorder %s13, 1
      %p140 = por %p138, %p139
      %p141 = scmp.ne.s32.totalorder %s133, %s136
      %p142 = scmp.eq.s32.totalorder %s13, 0
      %p143 = por %p141, %p142
      %p144 = scmp.ne.s32.totalorder %s133, %s136
      %p145 = scmp.eq.s32.totalorder %s18, 1
      %p146 = por %p144, %p145
      %p147 = scmp.ne.s32.totalorder %s136, %s137
      %p148 = scmp.eq.s32.totalorder %s18, 0
      %p149 = por %p147, %p148
      %p150 = scmp.ne.s32.totalorder %s136, %s137
      %p151 = scmp.eq.s32.totalorder %s19, 1
      %p152 = por %p150, %p151
      %p154 = scmp.ne.s32.totalorder %s137, %s153
      %p155 = scmp.eq.s32.totalorder %s19, 0
      %p156 = por %p154, %p155
      %p157 = scmp.le.s32.totalorder 1, %s13
      %p158 = scmp.lt.s32.totalorder %s13, 3
      %p159 = pnand %p157, %p158
      %p160 = pneg %p159
      // Predicated region
      $region9: #{tpu_custom_call.1} parent=5 // pred_check
        _
      $region10: #{tpu_custom_call.1} parent=5 // pred_check_branch
        %162 = sbr.rel (%p159) target = $region12
      $region11: #{tpu_custom_call.1} parent=5 // pred_region
        %s163 = ssub.s32 %s13, 1
        // Predicated region
        $region13: #{tpu_custom_call.1} parent=11 // pred_check
          %p164 = pneg %p72
        $region14: #{tpu_custom_call.1} parent=11 // pred_check_branch
          %166 = sbr.rel (%p164) target = $region16
        $region15: #{tpu_custom_call.1} parent=11 // pred_region
          _
        $region16: #{tpu_custom_call.1} parent=11 // pred_fallthru
          _
        // Predicated region
        $region17: #{tpu_custom_call.1} parent=11 // pred_check
          %p167 = pneg %p93
        $region18: #{tpu_custom_call.1} parent=11 // pred_check_branch
          %169 = sbr.rel (%p167) target = $region20
        $region19: #{tpu_custom_call.1} parent=11 // pred_region
          _
        $region20: #{tpu_custom_call.1} parent=11 // pred_fallthru
          _
      $region12: #{tpu_custom_call.1} parent=5 // pred_fallthru
        _
      %p170 = scmp.lt.s32.totalorder %s13, 2
      // Predicated region
      $region21: #{tpu_custom_call.1} parent=5 // pred_check
        %p171 = pneg %p170
      $region22: #{tpu_custom_call.1} parent=5 // pred_check_branch
        %173 = sbr.rel (%p171) target = $region24
      $region23: #{tpu_custom_call.1} parent=5 // pred_region
        // Predicated region
        $region25: #{tpu_custom_call.1} parent=23 // pred_check
          %p174 = pneg %p45
        $region26: #{tpu_custom_call.1} parent=23 // pred_check_branch
          %176 = sbr.rel (%p174) target = $region28
        $region27: #{tpu_custom_call.1} parent=23 // pred_region
          %p177 = scmp.lt.s32.totalorder %s20, 1
          %s178 = scalar_select %p177, %s20, 1
          %s179 = scalar_lea.vmem %s0, %s178
        $region28: #{tpu_custom_call.1} parent=23 // pred_fallthru
          _
        // Predicated region
        $region29: #{tpu_custom_call.1} parent=23 // pred_check
          %p180 = pneg %p115
        $region30: #{tpu_custom_call.1} parent=23 // pred_check_branch
          %182 = sbr.rel (%p180) target = $region32
        $region31: #{tpu_custom_call.1} parent=23 // pred_region
          %s183 = smul.u32 2, %s21
          %p184 = scmp.lt.s32.totalorder %s20, 1
          %s185 = scalar_select %p184, %s20, 1
          %p186 = scmp.lt.s32.totalorder %s183, 1
          %s187 = scalar_select %p186, %s183, 1
          %s188 = smul.addr %s185, 2
          %s189 = sadd.s32 %s187, %s188
          %s190 = smul.addr %s189, 4
          %s191 = scalar_lea.vmem %s3, %s190
          %s192 = smul.u32 2, %s21
        $region32: #{tpu_custom_call.1} parent=23 // pred_fallthru
          _
      $region24: #{tpu_custom_call.1} parent=5 // pred_fallthru
        _
      %p193 = scmp.le.s32.totalorder 1, %s13
      %p194 = scmp.lt.s32.totalorder %s13, 3
      %p195 = pnand %p193, %p194
      %p196 = pneg %p195
      // Predicated region
      $region33: #{tpu_custom_call.1} parent=5 // pred_check
        _
      $region34: #{tpu_custom_call.1} parent=5 // pred_check_branch
        %198 = sbr.rel (%p195) target = $region36
      $region35: #{tpu_custom_call.1} parent=5 // pred_region
        %s199 = ssub.s32 %s13, 1
        %p200 = scmp.lt.s32.totalorder %s22, 1
        %s201 = scalar_select %p200, %s22, 1
        %s202 = scalar_lea.vmem %s0, %s201
        %p203 = pneg %p51
        %p204 = pneg %p48
        %p205 = pneg %p72
        %p206 = pneg %p69
        %p207 = pneg %p93
        %p208 = pneg %p90
        %s209 = smul.u32 2, %s23
        %p210 = scmp.lt.s32.totalorder %s22, 1
        %s211 = scalar_select %p210, %s22, 1
        %p212 = scmp.lt.s32.totalorder %s209, 1
        %s213 = scalar_select %p212, %s209, 1
        %s214 = smul.addr %s211, 2
        %s215 = sadd.s32 %s213, %s214
        %s216 = smul.addr %s215, 4
        %s217 = scalar_lea.vmem %s3, %s216
        %p218 = pneg %p121
        %p219 = pneg %p118
        %p220 = pneg %p149
        %p221 = pneg %p146
        %s222 = sand.u32 %s136, 1
        %s223 = scalar_lea.sflag [#allocation3], %s222
        %s224 = sand.u32 %s136, 1
        %s225 = smul.addr %s224, 16
        %s226 = scalar_lea.vmem [#allocation2], %s225
        %p227 = scmp.lt.s32.totalorder %s22, 1
        %s228 = scalar_select %p227, %s22, 1
        %s229 = scalar_lea.vmem %s0, %s228
        %s230 = smul.u32 2, %s23
        %p231 = scmp.lt.s32.totalorder %s22, 1
        %s232 = scalar_select %p231, %s22, 1
        %p233 = scmp.lt.s32.totalorder %s230, 1
        %s234 = scalar_select %p233, %s230, 1
        %s235 = smul.addr %s232, 2
        %s236 = sadd.s32 %s234, %s235
        %s237 = smul.addr %s236, 4
        %s238 = scalar_lea.vmem %s3, %s237
        %s239 = smul.u32 2, %s23
        %s240 = smul.u32 2, %s23
        %v241 = vld [vmem:[%s238] sm:$0xff]
        %v242 = vld [vmem:[%s229] sm:$0x1]
        %v243 = vld [vmem:[%s1] sm:$0xff]
        %v245 = vlaneseq
        %v246 = vshrl.u32 %v245, 7
        %v247 = vsub.s32 0, %v246
        %v248 = vrot.slane %v242, %v247
        %v250 = vmul.f32 %v243, %v248
        %v251 = vmul.f32 %v250, %v250
        %vm252 = vcmask 31744
        %v253 = vsel %vm252, %v251, 0.0
        %254 = vadd.xlane.f32.xlu0 %v253
        %v255 = vpop.xlane.xlu0 %254
        %v256 = vadd.f32 %v255, 1e-08
        %v257 = vrsqrt.pop %v256
        %v258 = vmul.f32 %v257, 1.4142135
        %v259 = vmul.f32 %v250, %v258
        %v260 = vld [vmem:[%s2] sm:$0xff]
        %262 = vset.pattern.permute.xlu0 0
        %263 = vperm.xlu0 %262, %v260
        %v264 = vpop.permute.xlu0 %263
        %v267 = vcombine.high %v241, %v241
        %v269 = vsel %vm252, %v259, 0
        %vm271 = vcmask 1043456
        %v272 = vsel %vm271, %v241, 0
        %v274 = vsel %vm271, %v267, 0
        %276 = vmatprep.subr.mxu0 0.0
        %277 = vmatpush1.msra.mxu0 0.0
        %278 = vmatprep.subr.mxu0 0.0
        %279 = vmatpush1.msra.mxu0 0.0
        %280 = vmatprep.subr.mxu0 0.0
        %281 = vmatpush1.msra.mxu0 0.0
        %282 = vmatprep.subr.mxu0 0.0
        %283 = vmatpush1.msra.mxu0 0.0
        %284 = vmatprep.subr.mxu0 0.0
        %285 = vmatpush1.msra.mxu0 0.0
        %286 = vmatprep.subr.mxu0 0.0
        %287 = vmatpush1.msra.mxu0 0.0
        %288 = vmatprep.subr.mxu0 0.0
        %289 = vmatpush1.msra.mxu0 0.0
        %290 = vmatprep.subr.mxu0 0.0
        %291 = vmatpush1.msra.mxu0 0.0
        %292 = vmatprep.subr.mxu0 0.0
        %293 = vmatpush1.msra.mxu0 0.0
        %294 = vmatprep.subr.mxu0 0.0
        %295 = vmatpush1.msra.mxu0 0.0
        %296 = vmatprep.subr.mxu0 0.0
        %297 = vmatpush1.msra.mxu0 0.0
        %298 = vmatprep.subr.mxu0 0.0
        %299 = vmatpush1.msra.mxu0 0.0
        %300 = vmatprep.subr.mxu0 0.0
        %301 = vmatpush1.msra.mxu0 0.0
        %302 = vmatprep.subr.mxu0 0.0
        %303 = vmatpush1.msra.mxu0 0.0
        %304 = vmatprep.subr.mxu0 0.0
        %305 = vmatpush1.msra.mxu0 0.0
        %306 = vmatprep.subr.mxu0 %v274
        %307 = vmatpush1.msra.mxu0 %v272
        %308 = vmatprep.subr.mxu0 0.0
        %309 = vmatpush2.msra.mxu0 0.0
        %310 = vmatprep.subr.mxu0 0.0
        %311 = vmatpush2.msra.mxu0 0.0
        %312 = vmatprep.subr.mxu0 0.0
        %313 = vmatpush2.msra.mxu0 0.0
        %314 = vmatprep.subr.mxu0 0.0
        %315 = vmatpush2.msra.mxu0 0.0
        %316 = vmatprep.subr.mxu0 0.0
        %317 = vmatpush2.msra.mxu0 0.0
        %318 = vmatprep.subr.mxu0 0.0
        %319 = vmatpush2.msra.mxu0 0.0
        %320 = vmatprep.subr.mxu0 0.0
        %321 = vmatpush2.msra.mxu0 0.0
        %322 = vmatprep.subr.mxu0 0.0
        %323 = vmatpush2.msra.mxu0 0.0
        %324 = vmatprep.subr.mxu0 0.0
        %325 = vmatpush2.msra.mxu0 0.0
        %326 = vmatprep.subr.mxu0 0.0
        %327 = vmatpush2.msra.mxu0 0.0
        %328 = vmatprep.subr.mxu0 0.0
        %329 = vmatpush2.msra.mxu0 0.0
        %330 = vmatprep.subr.mxu0 0.0
        %331 = vmatpush2.msra.mxu0 0.0
        %332 = vmatprep.subr.mxu0 0.0
        %333 = vmatpush2.msra.mxu0 0.0
        %334 = vmatprep.subr.mxu0 0.0
        %335 = vmatpush2.msra.mxu0 0.0
        %336 = vmatprep.subr.mxu0 0.0
        %337 = vmatpush2.msra.mxu0 0.0
        %338 = vmatprep.subr.mxu0 0.0
        %339 = vmatpush2.msra.mxu0 0.0
        %340 = vmatprep.mubr.f32.mxu0 0.0
        %341 = vmatmul.mubr.f32.gmra.mxu0 %v269
        %v342 = vpop.f32.mrf.mxu0
        %v343 = vadd.f32 %v264, %v342
        %v344 = vpop.f32.mrf.mxu0
        %v345 = vadd.f32 %v264, %v344
        %346 = vdwg.mxu0
        %v347 = vmul.f32 %v343, 0.2
        %v348 = vmul.f32 %v345, 0.2
        %v349 = vmax.f32 %v343, %v347
        %v350 = vmax.f32 %v345, %v348
        %351 = vst [vmem:[%s226] sm:$0xff] %v349
        %352 = vst [vmem:[%s226 + $0x8] sm:$0xff] %v350
        %s353 = sand.u32 %s136, 1
        %s354 = scalar_lea.sflag [#allocation3], %s353
        %s355 = sand.u32 %s136, 1
        %s356 = smul.addr %s355, 16
        %s357 = scalar_lea.vmem [#allocation2], %s356
        // Predicated region
        $region37: #{tpu_custom_call.1} parent=35 // pred_check
          %p358 = pneg %p146
        $region38: #{tpu_custom_call.1} parent=35 // pred_check_branch
          %360 = sbr.rel (%p358) target = $region40
        $region39: #{tpu_custom_call.1} parent=35 // pred_region
          %s361 = smul.u32 2, %s23
          %s363 = ssub.s32 256, 256
          %364 = vsyncadd %s354, %s363
          %s365 = smul.addr %s22, 2
          %s366 = sadd.s32 %s361, %s365
          %s367 = smul.addr %s366, 128
          %s368 = scalar_lea.hbm %s4, %s367
          %s370 = sshll.u32 %s357, 4
          %s371 = int_to_ptr.vmem [resolvable:$true] %s370
          %373 = dma.vmem_to_hbm [thread:$0]  %s371, 256, %s368, %s354
        $region40: #{tpu_custom_call.1} parent=35 // pred_fallthru
          _
      $region36: #{tpu_custom_call.1} parent=5 // pred_fallthru
        _
      %p374 = scmp.le.s32.totalorder 2, %s13
      // Predicated region
      $region41: #{tpu_custom_call.1} parent=5 // pred_check
        %p375 = pneg %p374
      $region42: #{tpu_custom_call.1} parent=5 // pred_check_branch
        %377 = sbr.rel (%p375) target = $region44
      $region43: #{tpu_custom_call.1} parent=5 // pred_region
        %s378 = ssub.s32 %s13, 2
        // Predicated region
        $region45: #{tpu_custom_call.1} parent=43 // pred_check
          %p379 = pneg %p152
        $region46: #{tpu_custom_call.1} parent=43 // pred_check_branch
          %381 = sbr.rel (%p379) target = $region48
        $region47: #{tpu_custom_call.1} parent=43 // pred_region
          %s382 = sand.u32 %s137, 1
          %s383 = scalar_lea.sflag [#allocation3], %s382
          %s384 = sand.u32 %s137, 1
          %s385 = smul.addr %s384, 16
          %s386 = scalar_lea.vmem [#allocation2], %s385
          %387 = dma.done %s383, 256
        $region48: #{tpu_custom_call.1} parent=43 // pred_fallthru
          _
      $region44: #{tpu_custom_call.1} parent=5 // pred_fallthru
        _
    $region6: #{tpu_custom_call.1} parent=1 // loop_footer
      %s17 = sadd.s32 1, %s13
    $region7: #{tpu_custom_call.1} parent=1 // loop_footer_branch
      %12 = sbr.rel target = $region3
    $region8: #{tpu_custom_call.1} parent=1 // loop_exit
      _
    %388 = vsyncpa [#allocation3], 1
    %s389 = scalar_lea.sflag [#allocation3], 1
    %390 = vsyncpa %s389, 1

</llo_original>
